<compile_context>
chip_gen: v7x
topology: tpu7x:2x2x1
jax: 0.10.0
libtpu: 0.0.40
codegen_flags: <defaults>
</compile_context>

<pallas_src>
import functools

import jax
import jax.numpy as jnp
from jax.experimental import pallas as pl
from jax.experimental.pallas import tpu as pltpu


# ---------------------------------------------------------------------------
# Kernel
# ---------------------------------------------------------------------------
def mlp_kernel(x_ref, *refs):
    """Fused MLP on one row-major batch tile.

    x_ref:   (bb, d_in)  batch tile, batch on the sublane/M axis.
    refs:    [Wt_0, b_0, Wt_1, b_1, ..., out_ref] with Wt_i (in_i, out_i)
             (torch W_i transposed once on the host) and b_i (1, out_i).
    out_ref: (bb, d_out) batch tile of the output.
    """
    out_ref = refs[-1]
    param_refs = refs[:-1]
    n_layers = len(param_refs) // 2

    h = x_ref[...]                                    # (bb, in) f32
    for i in range(n_layers):
        wt = param_refs[2 * i][...]                   # (in_i, out_i): small, MXU-stationary
        b = param_refs[2 * i + 1][...]                # (1, out_i)
        h = jnp.dot(h, wt, preferred_element_type=jnp.float32) + b
        if i < n_layers - 1:
            h = jnp.maximum(h, 0.0)                   # nn.ReLU
    out_ref[...] = h.astype(out_ref.dtype)


# ---------------------------------------------------------------------------
# Parameters (mirror the PyTorch layer-size logic and nn.Linear init)
# ---------------------------------------------------------------------------
def make_network_params(key, dim, width, depth, model1=True, dtype=jnp.float32):
    """Returns [(W (out,in), b (out,)), ...] in torch layout."""
    sizes = [(dim, width)]           # (fan_in, fan_out) of the first Linear
    w_cur = width
    width_n = width
    if model1:
        for i in range(depth - 1):
            if i < 3:
                width_n = width * (i + 1)
            sizes.append((w_cur, width_n))
            w_cur = width_n
    else:
        for i in range(depth - 1):
            width_n = w_cur * 2
            sizes.append((w_cur, width_n))
            w_cur = width_n
    sizes.append((width_n, dim))     # final Linear(width_n, DIM)

    params = []
    for fan_in, fan_out in sizes:
        key, kw, kb = jax.random.split(key, 3)
        bound = 1.0 / (fan_in ** 0.5)
        W = jax.random.uniform(kw, (fan_out, fan_in), dtype, -bound, bound)
        b = jax.random.uniform(kb, (fan_out,), dtype, -bound, bound)
        params.append((W, b))
    return params


def prepare_kernel_params(params):
    """One-time (tiny) host-side relayout: W -> W.T (in,out), b -> (1,out)."""
    flat = []
    for W, b in params:
        flat.append(jnp.asarray(W).T)
        flat.append(jnp.asarray(b).reshape(1, -1))
    return flat


# ---------------------------------------------------------------------------
# Wrapper
# ---------------------------------------------------------------------------
def _round_up(v, m):
    return ((v + m - 1) // m) * m


def _choose_block(batch, block_b):
    """Batch tile: multiple of 8 sublanes; keep >=2 grid steps when the batch
    allows it so v7x can split the 'parallel' axis across its 2 TensorCores."""
    block_b = max(8, (block_b // 8) * 8)
    if batch > block_b:
        return block_b
    half = _round_up(pl.cdiv(batch, 2), 8)
    if 0 < half < batch:
        return half
    return batch


def _vmem_limit_bytes(bb):
    # (bb, 16) f32 I/O blocks are lane-padded to 128 in VMEM (bb*512 B each,
    # double-buffered) plus live layer intermediates; leave headroom but stay
    # below v7x's 64 MiB physical VMEM.
    est = 10 * bb * 512 + (16 << 20)
    return int(min(56 << 20, max(32 << 20, est)))


@functools.partial(jax.jit, static_argnames=("block_b",))
def network_forward(x, kernel_params, block_b=8192):
    """x: (B, DIM) row-major.  kernel_params: [Wt0, b0, Wt1, b1, ...].

    block_b is sweepable (static): ~4-8K on v5e, 8-16K on v6e, keep <=8-16K on
    v7x (64 MiB physical VMEM).  Per-step time is dominated by MXU pushes
    (~0.5 cyc/row) so even 4-8K already amortizes the ~0.35 us step overhead.
    """
    B, dim_in = x.shape
    n_layers = len(kernel_params) // 2
    dim_out = kernel_params[-2].shape[1]

    bb = _choose_block(B, block_b)
    grid = (pl.cdiv(B, bb),)

    # Weights/biases: full-array blocks with a constant block index -> the
    # Pallas pipeline issues their DMA only once (no per-step refetch).
    param_specs = []
    for i in range(n_layers):
        wt = kernel_params[2 * i]
        b = kernel_params[2 * i + 1]
        param_specs.append(pl.BlockSpec(wt.shape, lambda m: (0, 0)))
        param_specs.append(pl.BlockSpec(b.shape, lambda m: (0, 0)))

    return pl.pallas_call(
        mlp_kernel,
        out_shape=jax.ShapeDtypeStruct((B, dim_out), x.dtype),
        grid_spec=pltpu.PrefetchScalarGridSpec(
            num_scalar_prefetch=0,
            grid=grid,
            in_specs=[pl.BlockSpec((bb, dim_in), lambda m: (m, 0))] + param_specs,
            out_specs=pl.BlockSpec((bb, dim_out), lambda m: (m, 0)),
        ),
        compiler_params=pltpu.CompilerParams(
            dimension_semantics=("parallel",),
            vmem_limit_bytes=_vmem_limit_bytes(bb),
        ),
    )(x, *kernel_params)


# ---------------------------------------------------------------------------
# Pure-JAX reference of the PyTorch forward
# ---------------------------------------------------------------------------
def network_forward_ref(x, params):
    h = x
    n = len(params)
    for i, (W, b) in enumerate(params):
        h = h @ W.T + b
        if i < n - 1:
            h = jnp.maximum(h, 0.0)
    return h


if __name__ == "__main__":
    DIM, WIDTH, DEPTH, MODEL1 = 16, 32, 3, True
    B = 256   # small demo batch; splits into 2 blocks of 128 rows (grid=(2,))

    key = jax.random.PRNGKey(0)
    kx, kp = jax.random.split(key)
    x = jax.random.normal(kx, (B, DIM), jnp.float32)

    params = make_network_params(kp, DIM, WIDTH, DEPTH, model1=MODEL1)
    kparams = prepare_kernel_params(params)

    out = network_forward(x, kparams)
    out = jax.block_until_ready(out)

    ref = network_forward_ref(x, params)
    assert out.shape == (B, DIM), out.shape
    assert jnp.allclose(out, ref, atol=2e-4, rtol=2e-4), "mismatch vs reference"

    print("KERNEL_OK")
</pallas_src>

<mosaic_0001>
module attributes {stable_mosaic.version = 11 : i64} {
  func.func @mlp_kernel(%arg0: i32, %arg1: memref<128x16xf32, #tpu.memory_space<vmem>>, %arg2: memref<16x32xf32, #tpu.memory_space<vmem>>, %arg3: memref<1x32xf32, #tpu.memory_space<vmem>>, %arg4: memref<32x32xf32, #tpu.memory_space<vmem>>, %arg5: memref<1x32xf32, #tpu.memory_space<vmem>>, %arg6: memref<32x64xf32, #tpu.memory_space<vmem>>, %arg7: memref<1x64xf32, #tpu.memory_space<vmem>>, %arg8: memref<64x16xf32, #tpu.memory_space<vmem>>, %arg9: memref<1x16xf32, #tpu.memory_space<vmem>>, %arg10: memref<128x16xf32, #tpu.memory_space<vmem>>) attributes {dimension_semantics = [#tpu.dimension_semantics<parallel>], iteration_bounds = array<i64: 2>, scalar_prefetch = 0 : i64, scratch_operands = 0 : i64, tpu.core_type = #tpu.core_type<tc>, window_params = [{transform_indices = @transform_0, window_bounds = array<i64: 128, 16>}, {pipeline_mode = #tpu.pipeline_mode<synchronous>, transform_indices = @transform_1, window_bounds = array<i64: 16, 32>}, {pipeline_mode = #tpu.pipeline_mode<synchronous>, transform_indices = @transform_2, window_bounds = array<i64: 1, 32>}, {pipeline_mode = #tpu.pipeline_mode<synchronous>, transform_indices = @transform_3, window_bounds = array<i64: 32, 32>}, {pipeline_mode = #tpu.pipeline_mode<synchronous>, transform_indices = @transform_4, window_bounds = array<i64: 1, 32>}, {pipeline_mode = #tpu.pipeline_mode<synchronous>, transform_indices = @transform_5, window_bounds = array<i64: 32, 64>}, {pipeline_mode = #tpu.pipeline_mode<synchronous>, transform_indices = @transform_6, window_bounds = array<i64: 1, 64>}, {pipeline_mode = #tpu.pipeline_mode<synchronous>, transform_indices = @transform_7, window_bounds = array<i64: 64, 16>}, {pipeline_mode = #tpu.pipeline_mode<synchronous>, transform_indices = @transform_8, window_bounds = array<i64: 1, 16>}, {transform_indices = @transform_9, window_bounds = array<i64: 128, 16>}]} {
    %c0 = arith.constant 0 : index
    %c0_0 = arith.constant 0 : index
    %0 = vector.load %arg1[%c0, %c0_0] : memref<128x16xf32, #tpu.memory_space<vmem>>, vector<128x16xf32>
    %c0_1 = arith.constant 0 : index
    %c0_2 = arith.constant 0 : index
    %1 = vector.load %arg2[%c0_1, %c0_2] : memref<16x32xf32, #tpu.memory_space<vmem>>, vector<16x32xf32>
    %c0_3 = arith.constant 0 : index
    %c0_4 = arith.constant 0 : index
    %2 = vector.load %arg3[%c0_3, %c0_4] : memref<1x32xf32, #tpu.memory_space<vmem>>, vector<1x32xf32>
    %cst = arith.constant dense<0.000000e+00> : vector<128x32xf32>
    %3 = tpu.matmul %0, %1, %cst {dimension_numbers = #tpu.dot_dimension_numbers<[1], [0], [0], [1], [0, 0, 1, 1], [], []>} : vector<128x16xf32>, vector<16x32xf32>, vector<128x32xf32> -> vector<128x32xf32>
    %4 = vector.broadcast %2 : vector<1x32xf32> to vector<128x32xf32>
    %5 = arith.addf %3, %4 : vector<128x32xf32>
    %cst_5 = arith.constant 0.000000e+00 : f32
    %6 = vector.broadcast %cst_5 : f32 to vector<128x32xf32>
    %7 = arith.maximumf %5, %6 : vector<128x32xf32>
    %c0_6 = arith.constant 0 : index
    %c0_7 = arith.constant 0 : index
    %8 = vector.load %arg4[%c0_6, %c0_7] : memref<32x32xf32, #tpu.memory_space<vmem>>, vector<32x32xf32>
    %c0_8 = arith.constant 0 : index
    %c0_9 = arith.constant 0 : index
    %9 = vector.load %arg5[%c0_8, %c0_9] : memref<1x32xf32, #tpu.memory_space<vmem>>, vector<1x32xf32>
    %cst_10 = arith.constant dense<0.000000e+00> : vector<128x32xf32>
    %10 = tpu.matmul %7, %8, %cst_10 {dimension_numbers = #tpu.dot_dimension_numbers<[1], [0], [0], [1], [0, 0, 1, 1], [], []>} : vector<128x32xf32>, vector<32x32xf32>, vector<128x32xf32> -> vector<128x32xf32>
    %11 = vector.broadcast %9 : vector<1x32xf32> to vector<128x32xf32>
    %12 = arith.addf %10, %11 : vector<128x32xf32>
    %cst_11 = arith.constant 0.000000e+00 : f32
    %13 = vector.broadcast %cst_11 : f32 to vector<128x32xf32>
    %14 = arith.maximumf %12, %13 : vector<128x32xf32>
    %c0_12 = arith.constant 0 : index
    %c0_13 = arith.constant 0 : index
    %15 = vector.load %arg6[%c0_12, %c0_13] : memref<32x64xf32, #tpu.memory_space<vmem>>, vector<32x64xf32>
    %c0_14 = arith.constant 0 : index
    %c0_15 = arith.constant 0 : index
    %16 = vector.load %arg7[%c0_14, %c0_15] : memref<1x64xf32, #tpu.memory_space<vmem>>, vector<1x64xf32>
    %cst_16 = arith.constant dense<0.000000e+00> : vector<128x64xf32>
    %17 = tpu.matmul %14, %15, %cst_16 {dimension_numbers = #tpu.dot_dimension_numbers<[1], [0], [0], [1], [0, 0, 1, 1], [], []>} : vector<128x32xf32>, vector<32x64xf32>, vector<128x64xf32> -> vector<128x64xf32>
    %18 = vector.broadcast %16 : vector<1x64xf32> to vector<128x64xf32>
    %19 = arith.addf %17, %18 : vector<128x64xf32>
    %cst_17 = arith.constant 0.000000e+00 : f32
    %20 = vector.broadcast %cst_17 : f32 to vector<128x64xf32>
    %21 = arith.maximumf %19, %20 : vector<128x64xf32>
    %c0_18 = arith.constant 0 : index
    %c0_19 = arith.constant 0 : index
    %22 = vector.load %arg8[%c0_18, %c0_19] : memref<64x16xf32, #tpu.memory_space<vmem>>, vector<64x16xf32>
    %c0_20 = arith.constant 0 : index
    %c0_21 = arith.constant 0 : index
    %23 = vector.load %arg9[%c0_20, %c0_21] : memref<1x16xf32, #tpu.memory_space<vmem>>, vector<1x16xf32>
    %cst_22 = arith.constant dense<0.000000e+00> : vector<128x16xf32>
    %24 = tpu.matmul %21, %22, %cst_22 {dimension_numbers = #tpu.dot_dimension_numbers<[1], [0], [0], [1], [0, 0, 1, 1], [], []>} : vector<128x64xf32>, vector<64x16xf32>, vector<128x16xf32> -> vector<128x16xf32>
    %25 = vector.broadcast %23 : vector<1x16xf32> to vector<128x16xf32>
    %26 = arith.addf %24, %25 : vector<128x16xf32>
    %c0_23 = arith.constant 0 : index
    %c0_24 = arith.constant 0 : index
    %27 = vector.load %arg10[%c0_23, %c0_24] : memref<128x16xf32, #tpu.memory_space<vmem>>, vector<128x16xf32>
    tpu.vector_store %arg10[%c0_23, %c0_24], %26 {strides = array<i32>} : memref<128x16xf32, #tpu.memory_space<vmem>>, vector<128x16xf32>,
    return
  }
  func.func @transform_0(%arg0: i32) -> (i32, i32) {
    %c0_i32 = arith.constant 0 : i32
    %c0_i32_0 = arith.constant 0 : i32
    return %arg0, %c0_i32 : i32, i32
  }
  func.func @transform_1(%arg0: i32) -> (i32, i32) {
    %c0_i32 = arith.constant 0 : i32
    %c0_i32_0 = arith.constant 0 : i32
    %c0_i32_1 = arith.constant 0 : i32
    return %c0_i32, %c0_i32_0 : i32, i32
  }
  func.func @transform_2(%arg0: i32) -> (i32, i32) {
    %c0_i32 = arith.constant 0 : i32
    %c0_i32_0 = arith.constant 0 : i32
    %c0_i32_1 = arith.constant 0 : i32
    return %c0_i32, %c0_i32_0 : i32, i32
  }
  func.func @transform_3(%arg0: i32) -> (i32, i32) {
    %c0_i32 = arith.constant 0 : i32
    %c0_i32_0 = arith.constant 0 : i32
    %c0_i32_1 = arith.constant 0 : i32
    return %c0_i32, %c0_i32_0 : i32, i32
  }
  func.func @transform_4(%arg0: i32) -> (i32, i32) {
    %c0_i32 = arith.constant 0 : i32
    %c0_i32_0 = arith.constant 0 : i32
    %c0_i32_1 = arith.constant 0 : i32
    return %c0_i32, %c0_i32_0 : i32, i32
  }
  func.func @transform_5(%arg0: i32) -> (i32, i32) {
    %c0_i32 = arith.constant 0 : i32
    %c0_i32_0 = arith.constant 0 : i32
    %c0_i32_1 = arith.constant 0 : i32
    return %c0_i32, %c0_i32_0 : i32, i32
  }
  func.func @transform_6(%arg0: i32) -> (i32, i32) {
    %c0_i32 = arith.constant 0 : i32
    %c0_i32_0 = arith.constant 0 : i32
    %c0_i32_1 = arith.constant 0 : i32
    return %c0_i32, %c0_i32_0 : i32, i32
  }
  func.func @transform_7(%arg0: i32) -> (i32, i32) {
    %c0_i32 = arith.constant 0 : i32
    %c0_i32_0 = arith.constant 0 : i32
    %c0_i32_1 = arith.constant 0 : i32
    return %c0_i32, %c0_i32_0 : i32, i32
  }
  func.func @transform_8(%arg0: i32) -> (i32, i32) {
    %c0_i32 = arith.constant 0 : i32
    %c0_i32_0 = arith.constant 0 : i32
    %c0_i32_1 = arith.constant 0 : i32
    return %c0_i32, %c0_i32_0 : i32, i32
  }
  func.func @transform_9(%arg0: i32) -> (i32, i32) {
    %c0_i32 = arith.constant 0 : i32
    %c0_i32_0 = arith.constant 0 : i32
    return %arg0, %c0_i32 : i32, i32
  }
}

</mosaic_0001>

<llo_original>
// kernel: network_forward.1
$region0: #{network_forward.1}
  #allocation0 [shape = 'u32[]', space=smem, size = 0x4, offset = 0x4, fixed_abs, tag = 'smem constant byte address 0x4 - core index']
  #allocation1 [shape = 'u32[144,128]{1,0:T(1,128)}', space=vmem, size = 0x12000, scoped, tag = 'internal scratch']
  %s0 = inlined_call_operand.vmem [shape: f32[256,16], index: 0, kind: input, shape index: {}]
  %s1 = inlined_call_operand.vmem [shape: f32[16,32], index: 1, kind: input, shape index: {}]
  %s2 = inlined_call_operand.vmem [shape: f32[1,32], index: 2, kind: input, shape index: {}]
  %s3 = inlined_call_operand.vmem [shape: f32[32,32], index: 3, kind: input, shape index: {}]
  %s4 = inlined_call_operand.vmem [shape: f32[1,32], index: 4, kind: input, shape index: {}]
  %s5 = inlined_call_operand.vmem [shape: f32[32,64], index: 5, kind: input, shape index: {}]
  %s6 = inlined_call_operand.vmem [shape: f32[1,64], index: 6, kind: input, shape index: {}]
  %s7 = inlined_call_operand.vmem [shape: f32[64,16], index: 7, kind: input, shape index: {}]
  %s8 = inlined_call_operand.vmem [shape: f32[1,16], index: 8, kind: input, shape index: {}]
  %s9 = inlined_call_operand.vmem [shape: f32[256,16], index: 9, kind: output, shape index: {}]
  %s10 = sld [smem:[#allocation0]]
  $region69: #{network_forward.1} parent=0
    _
  %s12 = ssub.s32 1, %s10
  %s13 = scalar_select 0, %s12, %s10
  loop: start=0, step=1, limit=4
  $region2: #{network_forward.1} parent=0 // loop_pre_header
    _
  $region3: #{network_forward.1} parent=0 // loop_header
    %s15 = sphi 0, %s19
    %p16 = scmp.ge.s32.totalorder %s15, 4
    %s25 = sphi 0, %s27
    %s28 = sphi 0, %s25
    %s29 = sphi 0, %s28
    %s45 = sphi 0, %s29
    %s49 = sphi 0, %s49
    %s51 = sphi 0, %s49
    %s52 = sphi 0, %s51
    %s66 = sphi 0, %s52
    %s70 = sphi 0, %s70
    %s72 = sphi 0, %s70
    %s73 = sphi 0, %s72
    %s87 = sphi 0, %s73
    %s91 = sphi 0, %s91
    %s93 = sphi 0, %s91
    %s94 = sphi 0, %s93
    %s108 = sphi 0, %s94
    %s112 = sphi 0, %s112
    %s114 = sphi 0, %s112
    %s115 = sphi 0, %s114
    %s129 = sphi 0, %s115
    %s133 = sphi 0, %s133
    %s135 = sphi 0, %s133
    %s136 = sphi 0, %s135
    %s150 = sphi 0, %s136
    %s154 = sphi 0, %s154
    %s156 = sphi 0, %s154
    %s157 = sphi 0, %s156
    %s171 = sphi 0, %s157
    %s175 = sphi 0, %s175
    %s177 = sphi 0, %s175
    %s178 = sphi 0, %s177
    %s192 = sphi 0, %s178
    %s196 = sphi 0, %s196
    %s198 = sphi 0, %s196
    %s199 = sphi 0, %s198
    %s213 = sphi 0, %s199
    %s219 = sphi 0, %s221
    %s222 = sphi 0, %s219
    %s223 = sphi 0, %s222
    %s239 = sphi 0, %s223
  $region4: #{network_forward.1} parent=0 // loop_header_branch
    %18 = sbr.rel (%p16) target = $region8
  $region5: #{network_forward.1} parent=0 // loop_body
    %s20 = ssub.s32 %s15, 1
    %s21 = ssub.s32 %s15, 2
    %s22 = sadd.s32 %s15, 1
    %s23 = ssub.s32 %s15, %s22
    %p24 = scmp.eq.s32.totalorder %s23, 0
    %s26 = sadd.s32 %s25, 1
    %s27 = scalar_select %p24, %s25, %s26
    %p30 = pneg %p24
    %p31 = scmp.eq.s32.totalorder %s15, 1
    %p32 = por %p30, %p31
    %p33 = scmp.ne.s32.totalorder %s25, %s28
    %p34 = scmp.eq.s32.totalorder %s15, 0
    %p35 = por %p33, %p34
    %p36 = scmp.ne.s32.totalorder %s25, %s28
    %p37 = scmp.eq.s32.totalorder %s20, 1
    %p38 = por %p36, %p37
    %p39 = scmp.ne.s32.totalorder %s28, %s29
    %p40 = scmp.eq.s32.totalorder %s20, 0
    %p41 = por %p39, %p40
    %p42 = scmp.ne.s32.totalorder %s28, %s29
    %p43 = scmp.eq.s32.totalorder %s21, 1
    %p44 = por %p42, %p43
    %p46 = scmp.ne.s32.totalorder %s29, %s45
    %p47 = scmp.eq.s32.totalorder %s21, 0
    %p48 = por %p46, %p47
    %s50 = sadd.s32 %s49, 1
    %p53 = scmp.eq.s32.totalorder %s15, 1
    %p54 = scmp.ne.s32.totalorder %s49, %s51
    %p55 = scmp.eq.s32.totalorder %s15, 0
    %p56 = por %p54, %p55
    %p57 = scmp.ne.s32.totalorder %s49, %s51
    %p58 = scmp.eq.s32.totalorder %s20, 1
    %p59 = por %p57, %p58
    %p60 = scmp.ne.s32.totalorder %s51, %s52
    %p61 = scmp.eq.s32.totalorder %s20, 0
    %p62 = por %p60, %p61
    %p63 = scmp.ne.s32.totalorder %s51, %s52
    %p64 = scmp.eq.s32.totalorder %s21, 1
    %p65 = por %p63, %p64
    %p67 = scmp.ne.s32.totalorder %s52, %s66
    %p68 = scmp.eq.s32.totalorder %s21, 0
    %p69 = por %p67, %p68
    %s71 = sadd.s32 %s70, 1
    %p74 = scmp.eq.s32.totalorder %s15, 1
    %p75 = scmp.ne.s32.totalorder %s70, %s72
    %p76 = scmp.eq.s32.totalorder %s15, 0
    %p77 = por %p75, %p76
    %p78 = scmp.ne.s32.totalorder %s70, %s72
    %p79 = scmp.eq.s32.totalorder %s20, 1
    %p80 = por %p78, %p79
    %p81 = scmp.ne.s32.totalorder %s72, %s73
    %p82 = scmp.eq.s32.totalorder %s20, 0
    %p83 = por %p81, %p82
    %p84 = scmp.ne.s32.totalorder %s72, %s73
    %p85 = scmp.eq.s32.totalorder %s21, 1
    %p86 = por %p84, %p85
    %p88 = scmp.ne.s32.totalorder %s73, %s87
    %p89 = scmp.eq.s32.totalorder %s21, 0
    %p90 = por %p88, %p89
    %s92 = sadd.s32 %s91, 1
    %p95 = scmp.eq.s32.totalorder %s15, 1
    %p96 = scmp.ne.s32.totalorder %s91, %s93
    %p97 = scmp.eq.s32.totalorder %s15, 0
    %p98 = por %p96, %p97
    %p99 = scmp.ne.s32.totalorder %s91, %s93
    %p100 = scmp.eq.s32.totalorder %s20, 1
    %p101 = por %p99, %p100
    %p102 = scmp.ne.s32.totalorder %s93, %s94
    %p103 = scmp.eq.s32.totalorder %s20, 0
    %p104 = por %p102, %p103
    %p105 = scmp.ne.s32.totalorder %s93, %s94
    %p106 = scmp.eq.s32.totalorder %s21, 1
    %p107 = por %p105, %p106
    %p109 = scmp.ne.s32.totalorder %s94, %s108
    %p110 = scmp.eq.s32.totalorder %s21, 0
    %p111 = por %p109, %p110
    %s113 = sadd.s32 %s112, 1
    %p116 = scmp.eq.s32.totalorder %s15, 1
    %p117 = scmp.ne.s32.totalorder %s112, %s114
    %p118 = scmp.eq.s32.totalorder %s15, 0
    %p119 = por %p117, %p118
    %p120 = scmp.ne.s32.totalorder %s112, %s114
    %p121 = scmp.eq.s32.totalorder %s20, 1
    %p122 = por %p120, %p121
    %p123 = scmp.ne.s32.totalorder %s114, %s115
    %p124 = scmp.eq.s32.totalorder %s20, 0
    %p125 = por %p123, %p124
    %p126 = scmp.ne.s32.totalorder %s114, %s115
    %p127 = scmp.eq.s32.totalorder %s21, 1
    %p128 = por %p126, %p127
    %p130 = scmp.ne.s32.totalorder %s115, %s129
    %p131 = scmp.eq.s32.totalorder %s21, 0
    %p132 = por %p130, %p131
    %s134 = sadd.s32 %s133, 1
    %p137 = scmp.eq.s32.totalorder %s15, 1
    %p138 = scmp.ne.s32.totalorder %s133, %s135
    %p139 = scmp.eq.s32.totalorder %s15, 0
    %p140 = por %p138, %p139
    %p141 = scmp.ne.s32.totalorder %s133, %s135
    %p142 = scmp.eq.s32.totalorder %s20, 1
    %p143 = por %p141, %p142
    %p144 = scmp.ne.s32.totalorder %s135, %s136
    %p145 = scmp.eq.s32.totalorder %s20, 0
    %p146 = por %p144, %p145
    %p147 = scmp.ne.s32.totalorder %s135, %s136
    %p148 = scmp.eq.s32.totalorder %s21, 1
    %p149 = por %p147, %p148
    %p151 = scmp.ne.s32.totalorder %s136, %s150
    %p152 = scmp.eq.s32.totalorder %s21, 0
    %p153 = por %p151, %p152
    %s155 = sadd.s32 %s154, 1
    %p158 = scmp.eq.s32.totalorder %s15, 1
    %p159 = scmp.ne.s32.totalorder %s154, %s156
    %p160 = scmp.eq.s32.totalorder %s15, 0
    %p161 = por %p159, %p160
    %p162 = scmp.ne.s32.totalorder %s154, %s156
    %p163 = scmp.eq.s32.totalorder %s20, 1
    %p164 = por %p162, %p163
    %p165 = scmp.ne.s32.totalorder %s156, %s157
    %p166 = scmp.eq.s32.totalorder %s20, 0
    %p167 = por %p165, %p166
    %p168 = scmp.ne.s32.totalorder %s156, %s157
    %p169 = scmp.eq.s32.totalorder %s21, 1
    %p170 = por %p168, %p169
    %p172 = scmp.ne.s32.totalorder %s157, %s171
    %p173 = scmp.eq.s32.totalorder %s21, 0
    %p174 = por %p172, %p173
    %s176 = sadd.s32 %s175, 1
    %p179 = scmp.eq.s32.totalorder %s15, 1
    %p180 = scmp.ne.s32.totalorder %s175, %s177
    %p181 = scmp.eq.s32.totalorder %s15, 0
    %p182 = por %p180, %p181
    %p183 = scmp.ne.s32.totalorder %s175, %s177
    %p184 = scmp.eq.s32.totalorder %s20, 1
    %p185 = por %p183, %p184
    %p186 = scmp.ne.s32.totalorder %s177, %s178
    %p187 = scmp.eq.s32.totalorder %s20, 0
    %p188 = por %p186, %p187
    %p189 = scmp.ne.s32.totalorder %s177, %s178
    %p190 = scmp.eq.s32.totalorder %s21, 1
    %p191 = por %p189, %p190
    %p193 = scmp.ne.s32.totalorder %s178, %s192
    %p194 = scmp.eq.s32.totalorder %s21, 0
    %p195 = por %p193, %p194
    %s197 = sadd.s32 %s196, 1
    %p200 = scmp.eq.s32.totalorder %s15, 1
    %p201 = scmp.ne.s32.totalorder %s196, %s198
    %p202 = scmp.eq.s32.totalorder %s15, 0
    %p203 = por %p201, %p202
    %p204 = scmp.ne.s32.totalorder %s196, %s198
    %p205 = scmp.eq.s32.totalorder %s20, 1
    %p206 = por %p204, %p205
    %p207 = scmp.ne.s32.totalorder %s198, %s199
    %p208 = scmp.eq.s32.totalorder %s20, 0
    %p209 = por %p207, %p208
    %p210 = scmp.ne.s32.totalorder %s198, %s199
    %p211 = scmp.eq.s32.totalorder %s21, 1
    %p212 = por %p210, %p211
    %p214 = scmp.ne.s32.totalorder %s199, %s213
    %p215 = scmp.eq.s32.totalorder %s21, 0
    %p216 = por %p214, %p215
    %s217 = ssub.s32 %s15, %s22
    %p218 = scmp.eq.s32.totalorder %s217, 0
    %s220 = sadd.s32 %s219, 1
    %s221 = scalar_select %p218, %s219, %s220
    %p224 = pneg %p218
    %p225 = scmp.eq.s32.totalorder %s15, 1
    %p226 = por %p224, %p225
    %p227 = scmp.ne.s32.totalorder %s219, %s222
    %p228 = scmp.eq.s32.totalorder %s15, 0
    %p229 = por %p227, %p228
    %p230 = scmp.ne.s32.totalorder %s219, %s222
    %p231 = scmp.eq.s32.totalorder %s20, 1
    %p232 = por %p230, %p231
    %p233 = scmp.ne.s32.totalorder %s222, %s223
    %p234 = scmp.eq.s32.totalorder %s20, 0
    %p235 = por %p233, %p234
    %p236 = scmp.ne.s32.totalorder %s222, %s223
    %p237 = scmp.eq.s32.totalorder %s21, 1
    %p238 = por %p236, %p237
    %p240 = scmp.ne.s32.totalorder %s223, %s239
    %p241 = scmp.eq.s32.totalorder %s21, 0
    %p242 = por %p240, %p241
    %p243 = scmp.le.s32.totalorder 1, %s15
    %p244 = scmp.lt.s32.totalorder %s15, 3
    %p245 = pnand %p243, %p244
    %p246 = pneg %p245
    // Predicated region
    $region9: #{network_forward.1} parent=5 // pred_check
      _
    $region10: #{network_forward.1} parent=5 // pred_check_branch
      %248 = sbr.rel (%p245) target = $region12
    $region11: #{network_forward.1} parent=5 // pred_region
      %s249 = ssub.s32 %s15, 1
      // Predicated region
      $region13: #{network_forward.1} parent=11 // pred_check
        %p250 = pneg %p62
      $region14: #{network_forward.1} parent=11 // pred_check_branch
        %252 = sbr.rel (%p250) target = $region16
      $region15: #{network_forward.1} parent=11 // pred_region
        _
      $region16: #{network_forward.1} parent=11 // pred_fallthru
        _
      // Predicated region
      $region17: #{network_forward.1} parent=11 // pred_check
        %p253 = pneg %p83
      $region18: #{network_forward.1} parent=11 // pred_check_branch
        %255 = sbr.rel (%p253) target = $region20
      $region19: #{network_forward.1} parent=11 // pred_region
        _
      $region20: #{network_forward.1} parent=11 // pred_fallthru
        _
      // Predicated region
      $region21: #{network_forward.1} parent=11 // pred_check
        %p256 = pneg %p104
      $region22: #{network_forward.1} parent=11 // pred_check_branch
        %258 = sbr.rel (%p256) target = $region24
      $region23: #{network_forward.1} parent=11 // pred_region
        _
      $region24: #{network_forward.1} parent=11 // pred_fallthru
        _
      // Predicated region
      $region25: #{network_forward.1} parent=11 // pred_check
        %p259 = pneg %p125
      $region26: #{network_forward.1} parent=11 // pred_check_branch
        %261 = sbr.rel (%p259) target = $region28
      $region27: #{network_forward.1} parent=11 // pred_region
        _
      $region28: #{network_forward.1} parent=11 // pred_fallthru
        _
      // Predicated region
      $region29: #{network_forward.1} parent=11 // pred_check
        %p262 = pneg %p146
      $region30: #{network_forward.1} parent=11 // pred_check_branch
        %264 = sbr.rel (%p262) target = $region32
      $region31: #{network_forward.1} parent=11 // pred_region
        _
      $region32: #{network_forward.1} parent=11 // pred_fallthru
        _
      // Predicated region
      $region33: #{network_forward.1} parent=11 // pred_check
        %p265 = pneg %p167
      $region34: #{network_forward.1} parent=11 // pred_check_branch
        %267 = sbr.rel (%p265) target = $region36
      $region35: #{network_forward.1} parent=11 // pred_region
        _
      $region36: #{network_forward.1} parent=11 // pred_fallthru
        _
      // Predicated region
      $region37: #{network_forward.1} parent=11 // pred_check
        %p268 = pneg %p188
      $region38: #{network_forward.1} parent=11 // pred_check_branch
        %270 = sbr.rel (%p268) target = $region40
      $region39: #{network_forward.1} parent=11 // pred_region
        _
      $region40: #{network_forward.1} parent=11 // pred_fallthru
        _
      // Predicated region
      $region41: #{network_forward.1} parent=11 // pred_check
        %p271 = pneg %p209
      $region42: #{network_forward.1} parent=11 // pred_check_branch
        %273 = sbr.rel (%p271) target = $region44
      $region43: #{network_forward.1} parent=11 // pred_region
        _
      $region44: #{network_forward.1} parent=11 // pred_fallthru
        _
    $region12: #{network_forward.1} parent=5 // pred_fallthru
      _
    %p274 = scmp.lt.s32.totalorder %s15, 2
    // Predicated region
    $region45: #{network_forward.1} parent=5 // pred_check
      %p275 = pneg %p274
    $region46: #{network_forward.1} parent=5 // pred_check_branch
      %277 = sbr.rel (%p275) target = $region48
    $region47: #{network_forward.1} parent=5 // pred_region
      // Predicated region
      $region49: #{network_forward.1} parent=47 // pred_check
        %p278 = pneg %p35
      $region50: #{network_forward.1} parent=47 // pred_check_branch
        %280 = sbr.rel (%p278) target = $region52
      $region51: #{network_forward.1} parent=47 // pred_region
        %s281 = smul.u32 16, %s15
        %p282 = scmp.lt.s32.totalorder %s281, 31
        %s283 = scalar_select %p282, %s281, 31
        %s284 = smul.addr %s283, 8
        %s285 = scalar_lea.vmem %s0, %s284
        %s286 = smul.u32 16, %s15
      $region52: #{network_forward.1} parent=47 // pred_fallthru
        _
    $region48: #{network_forward.1} parent=5 // pred_fallthru
      _
    %p287 = scmp.le.s32.totalorder 1, %s15
    %p288 = scmp.lt.s32.totalorder %s15, 3
    %p289 = pnand %p287, %p288
    %p290 = pneg %p289
    // Predicated region
    $region53: #{network_forward.1} parent=5 // pred_check
      _
    $region54: #{network_forward.1} parent=5 // pred_check_branch
      %292 = sbr.rel (%p289) target = $region56
    $region55: #{network_forward.1} parent=5 // pred_region
      %s293 = ssub.s32 %s15, 1
      %s294 = smul.u32 16, %s20
      %p295 = scmp.lt.s32.totalorder %s294, 31
      %s296 = scalar_select %p295, %s294, 31
      %s297 = smul.addr %s296, 8
      %s298 = scalar_lea.vmem %s0, %s297
      %p299 = pneg %p41
      %p300 = pneg %p38
      %p301 = pneg %p62
      %p302 = pneg %p59
      %p303 = pneg %p83
      %p304 = pneg %p80
      %p305 = pneg %p104
      %p306 = pneg %p101
      %p307 = pneg %p125
      %p308 = pneg %p122
      %p309 = pneg %p146
      %p310 = pneg %p143
      %p311 = pneg %p167
      %p312 = pneg %p164
      %p313 = pneg %p188
      %p314 = pneg %p185
      %p315 = pneg %p209
      %p316 = pneg %p206
      %p317 = pneg %p235
      %p318 = pneg %p232
      %s319 = smul.u32 16, %s20
      %p320 = scmp.lt.s32.totalorder %s319, 31
      %s321 = scalar_select %p320, %s319, 31
      %s322 = smul.addr %s321, 8
      %s323 = scalar_lea.vmem %s9, %s322
      %s324 = smul.u32 16, %s20
      %p325 = scmp.lt.s32.totalorder %s324, 31
      %s326 = scalar_select %p325, %s324, 31
      %s327 = smul.addr %s326, 8
      %s328 = scalar_lea.vmem %s0, %s327
      %s329 = smul.u32 16, %s20
      %s330 = smul.u32 16, %s20
      %p331 = scmp.lt.s32.totalorder %s330, 31
      %s332 = scalar_select %p331, %s330, 31
      %s333 = smul.addr %s332, 8
      %s334 = scalar_lea.vmem %s9, %s333
      %s335 = smul.u32 16, %s20
      %v336 = vld [vmem:[%s328] sm:$0xff]
      %v337 = vld [vmem:[%s328 + $0x8] sm:$0xff]
      %v338 = vld [vmem:[%s328 + $0x10] sm:$0xff]
      %v339 = vld [vmem:[%s328 + $0x18] sm:$0xff]
      %v340 = vld [vmem:[%s328 + $0x20] sm:$0xff]
      %v341 = vld [vmem:[%s328 + $0x28] sm:$0xff]
      %v342 = vld [vmem:[%s328 + $0x30] sm:$0xff]
      %v343 = vld [vmem:[%s328 + $0x38] sm:$0xff]
      %v344 = vld [vmem:[%s328 + $0x40] sm:$0xff]
      %v345 = vld [vmem:[%s328 + $0x48] sm:$0xff]
      %v346 = vld [vmem:[%s328 + $0x50] sm:$0xff]
      %v347 = vld [vmem:[%s328 + $0x58] sm:$0xff]
      %v348 = vld [vmem:[%s328 + $0x60] sm:$0xff]
      %v349 = vld [vmem:[%s328 + $0x68] sm:$0xff]
      %v350 = vld [vmem:[%s328 + $0x70] sm:$0xff]
      %v351 = vld [vmem:[%s328 + $0x78] sm:$0xff]
      %v352 = vld [vmem:[%s1] sm:$0xff]
      %v353 = vld [vmem:[%s1 + $0x8] sm:$0xff]
      %v354 = vld [vmem:[%s2] sm:$0x1]
      %v356 = vlaneseq
      %v357 = vshrl.u32 %v356, 7
      %v358 = vsub.s32 0, %v357
      %v359 = vrot.slane %v354, %v358
      %vm361 = vcmask 130048
      %v363 = vsel %vm361, %v336, 0
      %v366 = vsel %vm361, %v337, 0
      %v369 = vsel %vm361, %v338, 0
      %v372 = vsel %vm361, %v339, 0
      %v375 = vsel %vm361, %v340, 0
      %v378 = vsel %vm361, %v341, 0
      %v381 = vsel %vm361, %v342, 0
      %v384 = vsel %vm361, %v343, 0
      %v387 = vsel %vm361, %v344, 0
      %v390 = vsel %vm361, %v345, 0
      %v393 = vsel %vm361, %v346, 0
      %v396 = vsel %vm361, %v347, 0
      %v399 = vsel %vm361, %v348, 0
      %v402 = vsel %vm361, %v349, 0
      %v405 = vsel %vm361, %v350, 0
      %v408 = vsel %vm361, %v351, 0
      %410 = vmatprep.subr.mxu0 0.0
      %411 = vmatpush1.msra.mxu0 %v352
      %412 = vmatprep.subr.mxu0 0.0
      %413 = vmatpush1.msra.mxu0 %v353
      %414 = vmatprep.subr.mxu0 0.0
      %415 = vmatpush1.msra.mxu0 0.0
      %416 = vmatprep.subr.mxu0 0.0
      %417 = vmatpush1.msra.mxu0 0.0
      %418 = vmatprep.subr.mxu0 0.0
      %419 = vmatpush1.msra.mxu0 0.0
      %420 = vmatprep.subr.mxu0 0.0
      %421 = vmatpush1.msra.mxu0 0.0
      %422 = vmatprep.subr.mxu0 0.0
      %423 = vmatpush1.msra.mxu0 0.0
      %424 = vmatprep.subr.mxu0 0.0
      %425 = vmatpush1.msra.mxu0 0.0
      %426 = vmatprep.subr.mxu0 0.0
      %427 = vmatpush1.msra.mxu0 0.0
      %428 = vmatprep.subr.mxu0 0.0
      %429 = vmatpush1.msra.mxu0 0.0
      %430 = vmatprep.subr.mxu0 0.0
      %431 = vmatpush1.msra.mxu0 0.0
      %432 = vmatprep.subr.mxu0 0.0
      %433 = vmatpush1.msra.mxu0 0.0
      %434 = vmatprep.subr.mxu0 0.0
      %435 = vmatpush1.msra.mxu0 0.0
      %436 = vmatprep.subr.mxu0 0.0
      %437 = vmatpush1.msra.mxu0 0.0
      %438 = vmatprep.subr.mxu0 0.0
      %439 = vmatpush1.msra.mxu0 0.0
      %440 = vmatprep.subr.mxu0 0.0
      %441 = vmatpush1.msra.mxu0 0.0
      %442 = vmatprep.subr.mxu0 0.0
      %443 = vmatpush1.msra.mxu0 0.0
      %444 = vmatprep.subr.mxu0 0.0
      %445 = vmatpush1.msra.mxu0 0.0
      %446 = vmatprep.subr.mxu0 0.0
      %447 = vmatpush1.msra.mxu0 0.0
      %448 = vmatprep.subr.mxu0 0.0
      %449 = vmatpush1.msra.mxu0 0.0
      %450 = vmatprep.subr.mxu0 0.0
      %451 = vmatpush1.msra.mxu0 0.0
      %452 = vmatprep.subr.mxu0 0.0
      %453 = vmatpush1.msra.mxu0 0.0
      %454 = vmatprep.subr.mxu0 0.0
      %455 = vmatpush1.msra.mxu0 0.0
      %456 = vmatprep.subr.mxu0 0.0
      %457 = vmatpush1.msra.mxu0 0.0
      %458 = vmatprep.subr.mxu0 0.0
      %459 = vmatpush1.msra.mxu0 0.0
      %460 = vmatprep.subr.mxu0 0.0
      %461 = vmatpush1.msra.mxu0 0.0
      %462 = vmatprep.subr.mxu0 0.0
      %463 = vmatpush1.msra.mxu0 0.0
      %464 = vmatprep.subr.mxu0 0.0
      %465 = vmatpush1.msra.mxu0 0.0
      %466 = vmatprep.subr.mxu0 0.0
      %467 = vmatpush1.msra.mxu0 0.0
      %468 = vmatprep.subr.mxu0 0.0
      %469 = vmatpush1.msra.mxu0 0.0
      %470 = vmatprep.subr.mxu0 0.0
      %471 = vmatpush1.msra.mxu0 0.0
      %472 = vmatprep.subr.mxu0 0.0
      %473 = vmatpush1.msra.mxu0 0.0
      %474 = vmatprep.mubr.f32.mxu0 0.0
      %475 = vmatmul.mubr.f32.gmra.mrb[0].mxu0 %v363
      %v476 = vpop.f32.mrb[0].mxu0
      %v477 = vadd.f32 %v359, %v476
      %v478 = vpop.f32.mrb[0].mxu0
      %479 = vmatprep.mubr.f32.mxu0 0.0
      %480 = vmatmul.mubr.f32.gmra.mrb[0].mxu0 %v366
      %v481 = vpop.f32.mrb[0].mxu0
      %v482 = vadd.f32 %v359, %v481
      %v483 = vpop.f32.mrb[0].mxu0
      %484 = vmatprep.mubr.f32.mxu0 0.0
      %485 = vmatmul.mubr.f32.gmra.mrb[0].mxu0 %v369
      %v486 = vpop.f32.mrb[0].mxu0
      %v487 = vadd.f32 %v359, %v486
      %v488 = vpop.f32.mrb[0].mxu0
      %489 = vmatprep.mubr.f32.mxu0 0.0
      %490 = vmatmul.mubr.f32.gmra.mrb[0].mxu0 %v372
      %v491 = vpop.f32.mrb[0].mxu0
      %v492 = vadd.f32 %v359, %v491
      %v493 = vpop.f32.mrb[0].mxu0
      %494 = vmatprep.mubr.f32.mxu0 0.0
      %495 = vmatmul.mubr.f32.gmra.mrb[0].mxu0 %v375
      %v496 = vpop.f32.mrb[0].mxu0
      %v497 = vadd.f32 %v359, %v496
      %v498 = vpop.f32.mrb[0].mxu0
      %499 = vmatprep.mubr.f32.mxu0 0.0
      %500 = vmatmul.mubr.f32.gmra.mrb[0].mxu0 %v378
      %v501 = vpop.f32.mrb[0].mxu0
      %v502 = vadd.f32 %v359, %v501
      %v503 = vpop.f32.mrb[0].mxu0
      %504 = vmatprep.mubr.f32.mxu0 0.0
      %505 = vmatmul.mubr.f32.gmra.mrb[0].mxu0 %v381
      %v506 = vpop.f32.mrb[0].mxu0
      %v507 = vadd.f32 %v359, %v506
      %v508 = vpop.f32.mrb[0].mxu0
      %509 = vmatprep.mubr.f32.mxu0 0.0
      %510 = vmatmul.mubr.f32.gmra.mrb[0].mxu0 %v384
      %v511 = vpop.f32.mrb[0].mxu0
      %v512 = vadd.f32 %v359, %v511
      %v513 = vpop.f32.mrb[0].mxu0
      %514 = vmatprep.mubr.f32.mxu0 0.0
      %515 = vmatmul.mubr.f32.gmra.mrb[0].mxu0 %v387
      %v516 = vpop.f32.mrb[0].mxu0
      %v517 = vadd.f32 %v359, %v516
      %v518 = vpop.f32.mrb[0].mxu0
      %519 = vmatprep.mubr.f32.mxu0 0.0
      %520 = vmatmul.mubr.f32.gmra.mrb[0].mxu0 %v390
      %v521 = vpop.f32.mrb[0].mxu0
      %v522 = vadd.f32 %v359, %v521
      %v523 = vpop.f32.mrb[0].mxu0
      %524 = vmatprep.mubr.f32.mxu0 0.0
      %525 = vmatmul.mubr.f32.gmra.mrb[0].mxu0 %v393
      %v526 = vpop.f32.mrb[0].mxu0
      %v527 = vadd.f32 %v359, %v526
      %v528 = vpop.f32.mrb[0].mxu0
      %529 = vmatprep.mubr.f32.mxu0 0.0
      %530 = vmatmul.mubr.f32.gmra.mrb[0].mxu0 %v396
      %v531 = vpop.f32.mrb[0].mxu0
      %v532 = vadd.f32 %v359, %v531
      %v533 = vpop.f32.mrb[0].mxu0
      %534 = vmatprep.mubr.f32.mxu0 0.0
      %535 = vmatmul.mubr.f32.gmra.mrb[0].mxu0 %v399
      %v536 = vpop.f32.mrb[0].mxu0
      %v537 = vadd.f32 %v359, %v536
      %v538 = vpop.f32.mrb[0].mxu0
      %539 = vmatprep.mubr.f32.mxu0 0.0
      %540 = vmatmul.mubr.f32.gmra.mrb[0].mxu0 %v402
      %v541 = vpop.f32.mrb[0].mxu0
      %v542 = vadd.f32 %v359, %v541
      %v543 = vpop.f32.mrb[0].mxu0
      %544 = vmatprep.mubr.f32.mxu0 0.0
      %545 = vmatmul.mubr.f32.gmra.mrb[0].mxu0 %v405
      %v546 = vpop.f32.mrb[0].mxu0
      %v547 = vadd.f32 %v359, %v546
      %v548 = vpop.f32.mrb[0].mxu0
      %549 = vmatprep.mubr.f32.mxu0 0.0
      %550 = vmatmul.mubr.f32.gmra.mrb[0].mxu0 %v408
      %v551 = vpop.f32.mrb[0].mxu0
      %v552 = vadd.f32 %v359, %v551
      %v553 = vpop.f32.mrb[0].mxu0
      %554 = vdwg.mxu0
      %v555 = vmax.f32 %v477, 0.0
      %v556 = vmax.f32 %v482, 0.0
      %v557 = vmax.f32 %v487, 0.0
      %v558 = vmax.f32 %v492, 0.0
      %v559 = vmax.f32 %v497, 0.0
      %v560 = vmax.f32 %v502, 0.0
      %v561 = vmax.f32 %v507, 0.0
      %v562 = vmax.f32 %v512, 0.0
      %v563 = vmax.f32 %v517, 0.0
      %v564 = vmax.f32 %v522, 0.0
      %v565 = vmax.f32 %v527, 0.0
      %v566 = vmax.f32 %v532, 0.0
      %v567 = vmax.f32 %v537, 0.0
      %v568 = vmax.f32 %v542, 0.0
      %v569 = vmax.f32 %v547, 0.0
      %v570 = vmax.f32 %v552, 0.0
      %v571 = vld [vmem:[%s3] sm:$0xff]
      %v572 = vld [vmem:[%s3 + $0x8] sm:$0xff]
      %v573 = vld [vmem:[%s3 + $0x10] sm:$0xff]
      %v574 = vld [vmem:[%s3 + $0x18] sm:$0xff]
      %v575 = vld [vmem:[%s4] sm:$0x1]
      %v577 = vlaneseq
      %v578 = vshrl.u32 %v577, 7
      %v579 = vsub.s32 0, %v578
      %v580 = vrot.slane %v575, %v579
      %vm582 = vcmask 261120
      %v584 = vsel %vm582, %v555, 0
      %v587 = vsel %vm582, %v556, 0
      %v590 = vsel %vm582, %v557, 0
      %v593 = vsel %vm582, %v558, 0
      %v596 = vsel %vm582, %v559, 0
      %v599 = vsel %vm582, %v560, 0
      %v602 = vsel %vm582, %v561, 0
      %v605 = vsel %vm582, %v562, 0
      %v608 = vsel %vm582, %v563, 0
      %v611 = vsel %vm582, %v564, 0
      %v614 = vsel %vm582, %v565, 0
      %v617 = vsel %vm582, %v566, 0
      %v620 = vsel %vm582, %v567, 0
      %v623 = vsel %vm582, %v568, 0
      %v626 = vsel %vm582, %v569, 0
      %v629 = vsel %vm582, %v570, 0
      %631 = vmatprep.subr.mxu0 0.0
      %632 = vmatpush1.msra.mxu0 %v571
      %633 = vmatprep.subr.mxu0 0.0
      %634 = vmatpush1.msra.mxu0 %v572
      %635 = vmatprep.subr.mxu0 0.0
      %636 = vmatpush1.msra.mxu0 %v573
      %637 = vmatprep.subr.mxu0 0.0
      %638 = vmatpush1.msra.mxu0 %v574
      %639 = vmatprep.subr.mxu0 0.0
      %640 = vmatpush1.msra.mxu0 0.0
      %641 = vmatprep.subr.mxu0 0.0
      %642 = vmatpush1.msra.mxu0 0.0
      %643 = vmatprep.subr.mxu0 0.0
      %644 = vmatpush1.msra.mxu0 0.0
      %645 = vmatprep.subr.mxu0 0.0
      %646 = vmatpush1.msra.mxu0 0.0
      %647 = vmatprep.subr.mxu0 0.0
      %648 = vmatpush1.msra.mxu0 0.0
      %649 = vmatprep.subr.mxu0 0.0
      %650 = vmatpush1.msra.mxu0 0.0
      %651 = vmatprep.subr.mxu0 0.0
      %652 = vmatpush1.msra.mxu0 0.0
      %653 = vmatprep.subr.mxu0 0.0
      %654 = vmatpush1.msra.mxu0 0.0
      %655 = vmatprep.subr.mxu0 0.0
      %656 = vmatpush1.msra.mxu0 0.0
      %657 = vmatprep.subr.mxu0 0.0
      %658 = vmatpush1.msra.mxu0 0.0
      %659 = vmatprep.subr.mxu0 0.0
      %660 = vmatpush1.msra.mxu0 0.0
      %661 = vmatprep.subr.mxu0 0.0
      %662 = vmatpush1.msra.mxu0 0.0
      %663 = vmatprep.subr.mxu0 0.0
      %664 = vmatpush1.msra.mxu0 0.0
      %665 = vmatprep.subr.mxu0 0.0
      %666 = vmatpush1.msra.mxu0 0.0
      %667 = vmatprep.subr.mxu0 0.0
      %668 = vmatpush1.msra.mxu0 0.0
      %669 = vmatprep.subr.mxu0 0.0
      %670 = vmatpush1.msra.mxu0 0.0
      %671 = vmatprep.subr.mxu0 0.0
      %672 = vmatpush1.msra.mxu0 0.0
      %673 = vmatprep.subr.mxu0 0.0
      %674 = vmatpush1.msra.mxu0 0.0
      %675 = vmatprep.subr.mxu0 0.0
      %676 = vmatpush1.msra.mxu0 0.0
      %677 = vmatprep.subr.mxu0 0.0
      %678 = vmatpush1.msra.mxu0 0.0
      %679 = vmatprep.subr.mxu0 0.0
      %680 = vmatpush1.msra.mxu0 0.0
      %681 = vmatprep.subr.mxu0 0.0
      %682 = vmatpush1.msra.mxu0 0.0
      %683 = vmatprep.subr.mxu0 0.0
      %684 = vmatpush1.msra.mxu0 0.0
      %685 = vmatprep.subr.mxu0 0.0
      %686 = vmatpush1.msra.mxu0 0.0
      %687 = vmatprep.subr.mxu0 0.0
      %688 = vmatpush1.msra.mxu0 0.0
      %689 = vmatprep.subr.mxu0 0.0
      %690 = vmatpush1.msra.mxu0 0.0
      %691 = vmatprep.subr.mxu0 0.0
      %692 = vmatpush1.msra.mxu0 0.0
      %693 = vmatprep.subr.mxu0 0.0
      %694 = vmatpush1.msra.mxu0 0.0
      %695 = vmatprep.mubr.f32.mxu0 0.0
      %696 = vmatmul.mubr.f32.gmra.mrb[0].mxu0 %v584
      %v697 = vpop.f32.mrb[0].mxu0
      %v698 = vadd.f32 %v580, %v697
      %v699 = vpop.f32.mrb[0].mxu0
      %700 = vmatprep.mubr.f32.mxu0 0.0
      %701 = vmatmul.mubr.f32.gmra.mrb[0].mxu0 %v587
      %v702 = vpop.f32.mrb[0].mxu0
      %v703 = vadd.f32 %v580, %v702
      %v704 = vpop.f32.mrb[0].mxu0
      %705 = vmatprep.mubr.f32.mxu0 0.0
      %706 = vmatmul.mubr.f32.gmra.mrb[0].mxu0 %v590
      %v707 = vpop.f32.mrb[0].mxu0
      %v708 = vadd.f32 %v580, %v707
      %v709 = vpop.f32.mrb[0].mxu0
      %710 = vmatprep.mubr.f32.mxu0 0.0
      %711 = vmatmul.mubr.f32.gmra.mrb[0].mxu0 %v593
      %v712 = vpop.f32.mrb[0].mxu0
      %v713 = vadd.f32 %v580, %v712
      %v714 = vpop.f32.mrb[0].mxu0
      %715 = vmatprep.mubr.f32.mxu0 0.0
      %716 = vmatmul.mubr.f32.gmra.mrb[0].mxu0 %v596
      %v717 = vpop.f32.mrb[0].mxu0
      %v718 = vadd.f32 %v580, %v717
      %v719 = vpop.f32.mrb[0].mxu0
      %720 = vmatprep.mubr.f32.mxu0 0.0
      %721 = vmatmul.mubr.f32.gmra.mrb[0].mxu0 %v599
      %v722 = vpop.f32.mrb[0].mxu0
      %v723 = vadd.f32 %v580, %v722
      %v724 = vpop.f32.mrb[0].mxu0
      %725 = vmatprep.mubr.f32.mxu0 0.0
      %726 = vmatmul.mubr.f32.gmra.mrb[0].mxu0 %v602
      %v727 = vpop.f32.mrb[0].mxu0
      %v728 = vadd.f32 %v580, %v727
      %v729 = vpop.f32.mrb[0].mxu0
      %730 = vmatprep.mubr.f32.mxu0 0.0
      %731 = vmatmul.mubr.f32.gmra.mrb[0].mxu0 %v605
      %v732 = vpop.f32.mrb[0].mxu0
      %v733 = vadd.f32 %v580, %v732
      %v734 = vpop.f32.mrb[0].mxu0
      %735 = vmatprep.mubr.f32.mxu0 0.0
      %736 = vmatmul.mubr.f32.gmra.mrb[0].mxu0 %v608
      %v737 = vpop.f32.mrb[0].mxu0
      %v738 = vadd.f32 %v580, %v737
      %v739 = vpop.f32.mrb[0].mxu0
      %740 = vmatprep.mubr.f32.mxu0 0.0
      %741 = vmatmul.mubr.f32.gmra.mrb[0].mxu0 %v611
      %v742 = vpop.f32.mrb[0].mxu0
      %v743 = vadd.f32 %v580, %v742
      %v744 = vpop.f32.mrb[0].mxu0
      %745 = vmatprep.mubr.f32.mxu0 0.0
      %746 = vmatmul.mubr.f32.gmra.mrb[0].mxu0 %v614
      %v747 = vpop.f32.mrb[0].mxu0
      %v748 = vadd.f32 %v580, %v747
      %v749 = vpop.f32.mrb[0].mxu0
      %750 = vmatprep.mubr.f32.mxu0 0.0
      %751 = vmatmul.mubr.f32.gmra.mrb[0].mxu0 %v617
      %v752 = vpop.f32.mrb[0].mxu0
      %v753 = vadd.f32 %v580, %v752
      %v754 = vpop.f32.mrb[0].mxu0
      %755 = vmatprep.mubr.f32.mxu0 0.0
      %756 = vmatmul.mubr.f32.gmra.mrb[0].mxu0 %v620
      %v757 = vpop.f32.mrb[0].mxu0
      %v758 = vadd.f32 %v580, %v757
      %v759 = vpop.f32.mrb[0].mxu0
      %760 = vmatprep.mubr.f32.mxu0 0.0
      %761 = vmatmul.mubr.f32.gmra.mrb[0].mxu0 %v623
      %v762 = vpop.f32.mrb[0].mxu0
      %v763 = vadd.f32 %v580, %v762
      %v764 = vpop.f32.mrb[0].mxu0
      %765 = vmatprep.mubr.f32.mxu0 0.0
      %766 = vmatmul.mubr.f32.gmra.mrb[0].mxu0 %v626
      %v767 = vpop.f32.mrb[0].mxu0
      %v768 = vadd.f32 %v580, %v767
      %v769 = vpop.f32.mrb[0].mxu0
      %770 = vmatprep.mubr.f32.mxu0 0.0
      %771 = vmatmul.mubr.f32.gmra.mrb[0].mxu0 %v629
      %v772 = vpop.f32.mrb[0].mxu0
      %v773 = vadd.f32 %v580, %v772
      %v774 = vpop.f32.mrb[0].mxu0
      %775 = vdwg.mxu0
      %v776 = vmax.f32 %v698, 0.0
      %v777 = vmax.f32 %v703, 0.0
      %v778 = vmax.f32 %v708, 0.0
      %v779 = vmax.f32 %v713, 0.0
      %v780 = vmax.f32 %v718, 0.0
      %v781 = vmax.f32 %v723, 0.0
      %v782 = vmax.f32 %v728, 0.0
      %v783 = vmax.f32 %v733, 0.0
      %v784 = vmax.f32 %v738, 0.0
      %v785 = vmax.f32 %v743, 0.0
      %v786 = vmax.f32 %v748, 0.0
      %v787 = vmax.f32 %v753, 0.0
      %v788 = vmax.f32 %v758, 0.0
      %v789 = vmax.f32 %v763, 0.0
      %v790 = vmax.f32 %v768, 0.0
      %v791 = vmax.f32 %v773, 0.0
      %v792 = vld [vmem:[%s5] sm:$0xff]
      %v793 = vld [vmem:[%s5 + $0x8] sm:$0xff]
      %v794 = vld [vmem:[%s5 + $0x10] sm:$0xff]
      %v795 = vld [vmem:[%s5 + $0x18] sm:$0xff]
      %v796 = vld [vmem:[%s6] sm:$0x1]
      %v798 = vlaneseq
      %v799 = vshrl.u32 %v798, 7
      %v800 = vsub.s32 0, %v799
      %v801 = vrot.slane %v796, %v800
      %v804 = vsel %vm582, %v776, 0
      %v807 = vsel %vm582, %v777, 0
      %v810 = vsel %vm582, %v778, 0
      %v813 = vsel %vm582, %v779, 0
      %v816 = vsel %vm582, %v780, 0
      %v819 = vsel %vm582, %v781, 0
      %v822 = vsel %vm582, %v782, 0
      %v825 = vsel %vm582, %v783, 0
      %v828 = vsel %vm582, %v784, 0
      %v831 = vsel %vm582, %v785, 0
      %v834 = vsel %vm582, %v786, 0
      %v837 = vsel %vm582, %v787, 0
      %v840 = vsel %vm582, %v788, 0
      %v843 = vsel %vm582, %v789, 0
      %v846 = vsel %vm582, %v790, 0
      %v849 = vsel %vm582, %v791, 0
      %851 = vmatprep.subr.mxu0 0.0
      %852 = vmatpush1.msra.mxu0 %v792
      %853 = vmatprep.subr.mxu0 0.0
      %854 = vmatpush1.msra.mxu0 %v793
      %855 = vmatprep.subr.mxu0 0.0
      %856 = vmatpush1.msra.mxu0 %v794
      %857 = vmatprep.subr.mxu0 0.0
      %858 = vmatpush1.msra.mxu0 %v795
      %859 = vmatprep.subr.mxu0 0.0
      %860 = vmatpush1.msra.mxu0 0.0
      %861 = vmatprep.subr.mxu0 0.0
      %862 = vmatpush1.msra.mxu0 0.0
      %863 = vmatprep.subr.mxu0 0.0
      %864 = vmatpush1.msra.mxu0 0.0
      %865 = vmatprep.subr.mxu0 0.0
      %866 = vmatpush1.msra.mxu0 0.0
      %867 = vmatprep.subr.mxu0 0.0
      %868 = vmatpush1.msra.mxu0 0.0
      %869 = vmatprep.subr.mxu0 0.0
      %870 = vmatpush1.msra.mxu0 0.0
      %871 = vmatprep.subr.mxu0 0.0
      %872 = vmatpush1.msra.mxu0 0.0
      %873 = vmatprep.subr.mxu0 0.0
      %874 = vmatpush1.msra.mxu0 0.0
      %875 = vmatprep.subr.mxu0 0.0
      %876 = vmatpush1.msra.mxu0 0.0
      %877 = vmatprep.subr.mxu0 0.0
      %878 = vmatpush1.msra.mxu0 0.0
      %879 = vmatprep.subr.mxu0 0.0
      %880 = vmatpush1.msra.mxu0 0.0
      %881 = vmatprep.subr.mxu0 0.0
      %882 = vmatpush1.msra.mxu0 0.0
      %883 = vmatprep.subr.mxu0 0.0
      %884 = vmatpush1.msra.mxu0 0.0
      %885 = vmatprep.subr.mxu0 0.0
      %886 = vmatpush1.msra.mxu0 0.0
      %887 = vmatprep.subr.mxu0 0.0
      %888 = vmatpush1.msra.mxu0 0.0
      %889 = vmatprep.subr.mxu0 0.0
      %890 = vmatpush1.msra.mxu0 0.0
      %891 = vmatprep.subr.mxu0 0.0
      %892 = vmatpush1.msra.mxu0 0.0
      %893 = vmatprep.subr.mxu0 0.0
      %894 = vmatpush1.msra.mxu0 0.0
      %895 = vmatprep.subr.mxu0 0.0
      %896 = vmatpush1.msra.mxu0 0.0
      %897 = vmatprep.subr.mxu0 0.0
      %898 = vmatpush1.msra.mxu0 0.0
      %899 = vmatprep.subr.mxu0 0.0
      %900 = vmatpush1.msra.mxu0 0.0
      %901 = vmatprep.subr.mxu0 0.0
      %902 = vmatpush1.msra.mxu0 0.0
      %903 = vmatprep.subr.mxu0 0.0
      %904 = vmatpush1.msra.mxu0 0.0
      %905 = vmatprep.subr.mxu0 0.0
      %906 = vmatpush1.msra.mxu0 0.0
      %907 = vmatprep.subr.mxu0 0.0
      %908 = vmatpush1.msra.mxu0 0.0
      %909 = vmatprep.subr.mxu0 0.0
      %910 = vmatpush1.msra.mxu0 0.0
      %911 = vmatprep.subr.mxu0 0.0
      %912 = vmatpush1.msra.mxu0 0.0
      %913 = vmatprep.subr.mxu0 0.0
      %914 = vmatpush1.msra.mxu0 0.0
      %915 = vmatprep.mubr.f32.mxu0 0.0
      %916 = vmatmul.mubr.f32.gmra.mrb[0].mxu0 %v804
      %v917 = vpop.f32.mrb[0].mxu0
      %v918 = vadd.f32 %v801, %v917
      %v919 = vpop.f32.mrb[0].mxu0
      %920 = vmatprep.mubr.f32.mxu0 0.0
      %921 = vmatmul.mubr.f32.gmra.mrb[0].mxu0 %v807
      %v922 = vpop.f32.mrb[0].mxu0
      %v923 = vadd.f32 %v801, %v922
      %v924 = vpop.f32.mrb[0].mxu0
      %925 = vmatprep.mubr.f32.mxu0 0.0
      %926 = vmatmul.mubr.f32.gmra.mrb[0].mxu0 %v810
      %v927 = vpop.f32.mrb[0].mxu0
      %v928 = vadd.f32 %v801, %v927
      %v929 = vpop.f32.mrb[0].mxu0
      %930 = vmatprep.mubr.f32.mxu0 0.0
      %931 = vmatmul.mubr.f32.gmra.mrb[0].mxu0 %v813
      %v932 = vpop.f32.mrb[0].mxu0
      %v933 = vadd.f32 %v801, %v932
      %v934 = vpop.f32.mrb[0].mxu0
      %935 = vmatprep.mubr.f32.mxu0 0.0
      %936 = vmatmul.mubr.f32.gmra.mrb[0].mxu0 %v816
      %v937 = vpop.f32.mrb[0].mxu0
      %v938 = vadd.f32 %v801, %v937
      %v939 = vpop.f32.mrb[0].mxu0
      %940 = vmatprep.mubr.f32.mxu0 0.0
      %941 = vmatmul.mubr.f32.gmra.mrb[0].mxu0 %v819
      %v942 = vpop.f32.mrb[0].mxu0
      %v943 = vadd.f32 %v801, %v942
      %v944 = vpop.f32.mrb[0].mxu0
      %945 = vmatprep.mubr.f32.mxu0 0.0
      %946 = vmatmul.mubr.f32.gmra.mrb[0].mxu0 %v822
      %v947 = vpop.f32.mrb[0].mxu0
      %v948 = vadd.f32 %v801, %v947
      %v949 = vpop.f32.mrb[0].mxu0
      %950 = vmatprep.mubr.f32.mxu0 0.0
      %951 = vmatmul.mubr.f32.gmra.mrb[0].mxu0 %v825
      %v952 = vpop.f32.mrb[0].mxu0
      %v953 = vadd.f32 %v801, %v952
      %v954 = vpop.f32.mrb[0].mxu0
      %955 = vmatprep.mubr.f32.mxu0 0.0
      %956 = vmatmul.mubr.f32.gmra.mrb[0].mxu0 %v828
      %v957 = vpop.f32.mrb[0].mxu0
      %v958 = vadd.f32 %v801, %v957
      %v959 = vpop.f32.mrb[0].mxu0
      %960 = vmatprep.mubr.f32.mxu0 0.0
      %961 = vmatmul.mubr.f32.gmra.mrb[0].mxu0 %v831
      %v962 = vpop.f32.mrb[0].mxu0
      %v963 = vadd.f32 %v801, %v962
      %v964 = vpop.f32.mrb[0].mxu0
      %965 = vmatprep.mubr.f32.mxu0 0.0
      %966 = vmatmul.mubr.f32.gmra.mrb[0].mxu0 %v834
      %v967 = vpop.f32.mrb[0].mxu0
      %v968 = vadd.f32 %v801, %v967
      %v969 = vpop.f32.mrb[0].mxu0
      %970 = vmatprep.mubr.f32.mxu0 0.0
      %971 = vmatmul.mubr.f32.gmra.mrb[0].mxu0 %v837
      %v972 = vpop.f32.mrb[0].mxu0
      %v973 = vadd.f32 %v801, %v972
      %v974 = vpop.f32.mrb[0].mxu0
      %975 = vmatprep.mubr.f32.mxu0 0.0
      %976 = vmatmul.mubr.f32.gmra.mrb[0].mxu0 %v840
      %v977 = vpop.f32.mrb[0].mxu0
      %v978 = vadd.f32 %v801, %v977
      %v979 = vpop.f32.mrb[0].mxu0
      %980 = vmatprep.mubr.f32.mxu0 0.0
      %981 = vmatmul.mubr.f32.gmra.mrb[0].mxu0 %v843
      %v982 = vpop.f32.mrb[0].mxu0
      %v983 = vadd.f32 %v801, %v982
      %v984 = vpop.f32.mrb[0].mxu0
      %985 = vmatprep.mubr.f32.mxu0 0.0
      %986 = vmatmul.mubr.f32.gmra.mrb[0].mxu0 %v846
      %v987 = vpop.f32.mrb[0].mxu0
      %v988 = vadd.f32 %v801, %v987
      %v989 = vpop.f32.mrb[0].mxu0
      %990 = vmatprep.mubr.f32.mxu0 0.0
      %991 = vmatmul.mubr.f32.gmra.mrb[0].mxu0 %v849
      %v992 = vpop.f32.mrb[0].mxu0
      %v993 = vadd.f32 %v801, %v992
      %v994 = vpop.f32.mrb[0].mxu0
      %995 = vdwg.mxu0
      %v996 = vmax.f32 %v918, 0.0
      %v997 = vmax.f32 %v923, 0.0
      %v998 = vmax.f32 %v928, 0.0
      %v999 = vmax.f32 %v933, 0.0
      %v1000 = vmax.f32 %v938, 0.0
      %v1001 = vmax.f32 %v943, 0.0
      %v1002 = vmax.f32 %v948, 0.0
      %v1003 = vmax.f32 %v953, 0.0
      %v1004 = vmax.f32 %v958, 0.0
      %v1005 = vmax.f32 %v963, 0.0
      %v1006 = vmax.f32 %v968, 0.0
      %v1007 = vmax.f32 %v973, 0.0
      %v1008 = vmax.f32 %v978, 0.0
      %v1009 = vmax.f32 %v983, 0.0
      %v1010 = vmax.f32 %v988, 0.0
      %v1011 = vmax.f32 %v993, 0.0
      %v1012 = vld [vmem:[%s7] sm:$0xff]
      %v1013 = vld [vmem:[%s7 + $0x8] sm:$0xff]
      %v1014 = vld [vmem:[%s7 + $0x10] sm:$0xff]
      %v1015 = vld [vmem:[%s7 + $0x18] sm:$0xff]
      %v1016 = vld [vmem:[%s7 + $0x20] sm:$0xff]
      %v1017 = vld [vmem:[%s7 + $0x28] sm:$0xff]
      %v1018 = vld [vmem:[%s7 + $0x30] sm:$0xff]
      %v1019 = vld [vmem:[%s7 + $0x38] sm:$0xff]
      %v1020 = vld [vmem:[%s8] sm:$0x1]
      %v1022 = vlaneseq
      %v1023 = vshrl.u32 %v1022, 7
      %v1024 = vsub.s32 0, %v1023
      %v1025 = vrot.slane %v1020, %v1024
      %vm1027 = vcmask 523264
      %v1029 = vsel %vm1027, %v996, 0
      %v1032 = vsel %vm1027, %v997, 0
      %v1035 = vsel %vm1027, %v998, 0
      %v1038 = vsel %vm1027, %v999, 0
      %v1041 = vsel %vm1027, %v1000, 0
      %v1044 = vsel %vm1027, %v1001, 0
      %v1047 = vsel %vm1027, %v1002, 0
      %v1050 = vsel %vm1027, %v1003, 0
      %v1053 = vsel %vm1027, %v1004, 0
      %v1056 = vsel %vm1027, %v1005, 0
      %v1059 = vsel %vm1027, %v1006, 0
      %v1062 = vsel %vm1027, %v1007, 0
      %v1065 = vsel %vm1027, %v1008, 0
      %v1068 = vsel %vm1027, %v1009, 0
      %v1071 = vsel %vm1027, %v1010, 0
      %v1074 = vsel %vm1027, %v1011, 0
      %1076 = vmatprep.subr.mxu0 0.0
      %1077 = vmatpush1.msra.mxu0 %v1012
      %1078 = vmatprep.subr.mxu0 0.0
      %1079 = vmatpush1.msra.mxu0 %v1013
      %1080 = vmatprep.subr.mxu0 0.0
      %1081 = vmatpush1.msra.mxu0 %v1014
      %1082 = vmatprep.subr.mxu0 0.0
      %1083 = vmatpush1.msra.mxu0 %v1015
      %1084 = vmatprep.subr.mxu0 0.0
      %1085 = vmatpush1.msra.mxu0 %v1016
      %1086 = vmatprep.subr.mxu0 0.0
      %1087 = vmatpush1.msra.mxu0 %v1017
      %1088 = vmatprep.subr.mxu0 0.0
      %1089 = vmatpush1.msra.mxu0 %v1018
      %1090 = vmatprep.subr.mxu0 0.0
      %1091 = vmatpush1.msra.mxu0 %v1019
      %1092 = vmatprep.subr.mxu0 0.0
      %1093 = vmatpush1.msra.mxu0 0.0
      %1094 = vmatprep.subr.mxu0 0.0
      %1095 = vmatpush1.msra.mxu0 0.0
      %1096 = vmatprep.subr.mxu0 0.0
      %1097 = vmatpush1.msra.mxu0 0.0
      %1098 = vmatprep.subr.mxu0 0.0
      %1099 = vmatpush1.msra.mxu0 0.0
      %1100 = vmatprep.subr.mxu0 0.0
      %1101 = vmatpush1.msra.mxu0 0.0
      %1102 = vmatprep.subr.mxu0 0.0
      %1103 = vmatpush1.msra.mxu0 0.0
      %1104 = vmatprep.subr.mxu0 0.0
      %1105 = vmatpush1.msra.mxu0 0.0
      %1106 = vmatprep.subr.mxu0 0.0
      %1107 = vmatpush1.msra.mxu0 0.0
      %1108 = vmatprep.subr.mxu0 0.0
      %1109 = vmatpush1.msra.mxu0 0.0
      %1110 = vmatprep.subr.mxu0 0.0
      %1111 = vmatpush1.msra.mxu0 0.0
      %1112 = vmatprep.subr.mxu0 0.0
      %1113 = vmatpush1.msra.mxu0 0.0
      %1114 = vmatprep.subr.mxu0 0.0
      %1115 = vmatpush1.msra.mxu0 0.0
      %1116 = vmatprep.subr.mxu0 0.0
      %1117 = vmatpush1.msra.mxu0 0.0
      %1118 = vmatprep.subr.mxu0 0.0
      %1119 = vmatpush1.msra.mxu0 0.0
      %1120 = vmatprep.subr.mxu0 0.0
      %1121 = vmatpush1.msra.mxu0 0.0
      %1122 = vmatprep.subr.mxu0 0.0
      %1123 = vmatpush1.msra.mxu0 0.0
      %1124 = vmatprep.subr.mxu0 0.0
      %1125 = vmatpush1.msra.mxu0 0.0
      %1126 = vmatprep.subr.mxu0 0.0
      %1127 = vmatpush1.msra.mxu0 0.0
      %1128 = vmatprep.subr.mxu0 0.0
      %1129 = vmatpush1.msra.mxu0 0.0
      %1130 = vmatprep.subr.mxu0 0.0
      %1131 = vmatpush1.msra.mxu0 0.0
      %1132 = vmatprep.subr.mxu0 0.0
      %1133 = vmatpush1.msra.mxu0 0.0
      %1134 = vmatprep.subr.mxu0 0.0
      %1135 = vmatpush1.msra.mxu0 0.0
      %1136 = vmatprep.subr.mxu0 0.0
      %1137 = vmatpush1.msra.mxu0 0.0
      %1138 = vmatprep.subr.mxu0 0.0
      %1139 = vmatpush1.msra.mxu0 0.0
      %1140 = vmatprep.mubr.f32.mxu0 0.0
      %1141 = vmatmul.mubr.f32.gmra.mrb[0].mxu0 %v1029
      %v1142 = vpop.f32.mrb[0].mxu0
      %v1143 = vadd.f32 %v1025, %v1142
      %v1144 = vpop.f32.mrb[0].mxu0
      %1145 = vmatprep.mubr.f32.mxu0 0.0
      %1146 = vmatmul.mubr.f32.gmra.mrb[0].mxu0 %v1032
      %v1147 = vpop.f32.mrb[0].mxu0
      %v1148 = vadd.f32 %v1025, %v1147
      %v1149 = vpop.f32.mrb[0].mxu0
      %1150 = vmatprep.mubr.f32.mxu0 0.0
      %1151 = vmatmul.mubr.f32.gmra.mrb[0].mxu0 %v1035
      %v1152 = vpop.f32.mrb[0].mxu0
      %v1153 = vadd.f32 %v1025, %v1152
      %v1154 = vpop.f32.mrb[0].mxu0
      %1155 = vmatprep.mubr.f32.mxu0 0.0
      %1156 = vmatmul.mubr.f32.gmra.mrb[0].mxu0 %v1038
      %v1157 = vpop.f32.mrb[0].mxu0
      %v1158 = vadd.f32 %v1025, %v1157
      %v1159 = vpop.f32.mrb[0].mxu0
      %1160 = vmatprep.mubr.f32.mxu0 0.0
      %1161 = vmatmul.mubr.f32.gmra.mrb[0].mxu0 %v1041
      %v1162 = vpop.f32.mrb[0].mxu0
      %v1163 = vadd.f32 %v1025, %v1162
      %v1164 = vpop.f32.mrb[0].mxu0
      %1165 = vmatprep.mubr.f32.mxu0 0.0
      %1166 = vmatmul.mubr.f32.gmra.mrb[0].mxu0 %v1044
      %v1167 = vpop.f32.mrb[0].mxu0
      %v1168 = vadd.f32 %v1025, %v1167
      %v1169 = vpop.f32.mrb[0].mxu0
      %1170 = vmatprep.mubr.f32.mxu0 0.0
      %1171 = vmatmul.mubr.f32.gmra.mrb[0].mxu0 %v1047
      %v1172 = vpop.f32.mrb[0].mxu0
      %v1173 = vadd.f32 %v1025, %v1172
      %v1174 = vpop.f32.mrb[0].mxu0
      %1175 = vmatprep.mubr.f32.mxu0 0.0
      %1176 = vmatmul.mubr.f32.gmra.mrb[0].mxu0 %v1050
      %v1177 = vpop.f32.mrb[0].mxu0
      %v1178 = vadd.f32 %v1025, %v1177
      %v1179 = vpop.f32.mrb[0].mxu0
      %1180 = vmatprep.mubr.f32.mxu0 0.0
      %1181 = vmatmul.mubr.f32.gmra.mrb[0].mxu0 %v1053
      %v1182 = vpop.f32.mrb[0].mxu0
      %v1183 = vadd.f32 %v1025, %v1182
      %v1184 = vpop.f32.mrb[0].mxu0
      %1185 = vmatprep.mubr.f32.mxu0 0.0
      %1186 = vmatmul.mubr.f32.gmra.mrb[0].mxu0 %v1056
      %v1187 = vpop.f32.mrb[0].mxu0
      %v1188 = vadd.f32 %v1025, %v1187
      %v1189 = vpop.f32.mrb[0].mxu0
      %1190 = vmatprep.mubr.f32.mxu0 0.0
      %1191 = vmatmul.mubr.f32.gmra.mrb[0].mxu0 %v1059
      %v1192 = vpop.f32.mrb[0].mxu0
      %v1193 = vadd.f32 %v1025, %v1192
      %v1194 = vpop.f32.mrb[0].mxu0
      %1195 = vmatprep.mubr.f32.mxu0 0.0
      %1196 = vmatmul.mubr.f32.gmra.mrb[0].mxu0 %v1062
      %v1197 = vpop.f32.mrb[0].mxu0
      %v1198 = vadd.f32 %v1025, %v1197
      %v1199 = vpop.f32.mrb[0].mxu0
      %1200 = vmatprep.mubr.f32.mxu0 0.0
      %1201 = vmatmul.mubr.f32.gmra.mrb[0].mxu0 %v1065
      %v1202 = vpop.f32.mrb[0].mxu0
      %v1203 = vadd.f32 %v1025, %v1202
      %v1204 = vpop.f32.mrb[0].mxu0
      %1205 = vmatprep.mubr.f32.mxu0 0.0
      %1206 = vmatmul.mubr.f32.gmra.mrb[0].mxu0 %v1068
      %v1207 = vpop.f32.mrb[0].mxu0
      %v1208 = vadd.f32 %v1025, %v1207
      %v1209 = vpop.f32.mrb[0].mxu0
      %1210 = vmatprep.mubr.f32.mxu0 0.0
      %1211 = vmatmul.mubr.f32.gmra.mrb[0].mxu0 %v1071
      %v1212 = vpop.f32.mrb[0].mxu0
      %v1213 = vadd.f32 %v1025, %v1212
      %v1214 = vpop.f32.mrb[0].mxu0
      %1215 = vmatprep.mubr.f32.mxu0 0.0
      %1216 = vmatmul.mubr.f32.gmra.mrb[0].mxu0 %v1074
      %v1217 = vpop.f32.mrb[0].mxu0
      %v1218 = vadd.f32 %v1025, %v1217
      %v1219 = vpop.f32.mrb[0].mxu0
      %1220 = vdwg.mxu0
      %1221 = vst.msk [vmem:[%s334] sm:$0xff] %vm361, %v1143
      %1222 = vst.msk [vmem:[%s334 + $0x8] sm:$0xff] %vm361, %v1148
      %1223 = vst.msk [vmem:[%s334 + $0x10] sm:$0xff] %vm361, %v1153
      %1224 = vst.msk [vmem:[%s334 + $0x18] sm:$0xff] %vm361, %v1158
      %1225 = vst.msk [vmem:[%s334 + $0x20] sm:$0xff] %vm361, %v1163
      %1226 = vst.msk [vmem:[%s334 + $0x28] sm:$0xff] %vm361, %v1168
      %1227 = vst.msk [vmem:[%s334 + $0x30] sm:$0xff] %vm361, %v1173
      %1228 = vst.msk [vmem:[%s334 + $0x38] sm:$0xff] %vm361, %v1178
      %1229 = vst.msk [vmem:[%s334 + $0x40] sm:$0xff] %vm361, %v1183
      %1230 = vst.msk [vmem:[%s334 + $0x48] sm:$0xff] %vm361, %v1188
      %1231 = vst.msk [vmem:[%s334 + $0x50] sm:$0xff] %vm361, %v1193
      %1232 = vst.msk [vmem:[%s334 + $0x58] sm:$0xff] %vm361, %v1198
      %1233 = vst.msk [vmem:[%s334 + $0x60] sm:$0xff] %vm361, %v1203
      %1234 = vst.msk [vmem:[%s334 + $0x68] sm:$0xff] %vm361, %v1208
      %1235 = vst.msk [vmem:[%s334 + $0x70] sm:$0xff] %vm361, %v1213
      %1236 = vst.msk [vmem:[%s334 + $0x78] sm:$0xff] %vm361, %v1218
      %s1237 = smul.u32 16, %s20
      %p1238 = scmp.lt.s32.totalorder %s1237, 31
      %s1239 = scalar_select %p1238, %s1237, 31
      %s1240 = smul.addr %s1239, 8
      %s1241 = scalar_lea.vmem %s9, %s1240
      // Predicated region
      $region57: #{network_forward.1} parent=55 // pred_check
        %p1242 = pneg %p232
      $region58: #{network_forward.1} parent=55 // pred_check_branch
        %1244 = sbr.rel (%p1242) target = $region60
      $region59: #{network_forward.1} parent=55 // pred_region
        %s1245 = smul.u32 16, %s20
      $region60: #{network_forward.1} parent=55 // pred_fallthru
        _
    $region56: #{network_forward.1} parent=5 // pred_fallthru
      _
    %p1246 = scmp.le.s32.totalorder 2, %s15
    // Predicated region
    $region61: #{network_forward.1} parent=5 // pred_check
      %p1247 = pneg %p1246
    $region62: #{network_forward.1} parent=5 // pred_check_branch
      %1249 = sbr.rel (%p1247) target = $region64
    $region63: #{network_forward.1} parent=5 // pred_region
      %s1250 = ssub.s32 %s15, 2
      // Predicated region
      $region65: #{network_forward.1} parent=63 // pred_check
        %p1251 = pneg %p238
      $region66: #{network_forward.1} parent=63 // pred_check_branch
        %1253 = sbr.rel (%p1251) target = $region68
      $region67: #{network_forward.1} parent=63 // pred_region
        %s1254 = smul.u32 16, %s21
        %p1255 = scmp.lt.s32.totalorder %s1254, 31
        %s1256 = scalar_select %p1255, %s1254, 31
        %s1257 = smul.addr %s1256, 8
        %s1258 = scalar_lea.vmem %s9, %s1257
      $region68: #{network_forward.1} parent=63 // pred_fallthru
        _
    $region64: #{network_forward.1} parent=5 // pred_fallthru
      _
  $region6: #{network_forward.1} parent=0 // loop_footer
    %s19 = sadd.s32 1, %s15
  $region7: #{network_forward.1} parent=0 // loop_footer_branch
    %14 = sbr.rel target = $region3
  $region8: #{network_forward.1} parent=0 // loop_exit
    _

</llo_original>
